<compile_context>
chip_gen: v6e
topology: v6e:2x2x1
jax: 0.10.0
libtpu: 0.0.40
codegen_flags: <defaults>
</compile_context>

<pallas_src>
import jax
import jax.numpy as jnp
from jax import lax
from jax.experimental import pallas as pl
from jax.experimental.pallas import tpu as pltpu

EPS = 1e-5


def bottleneck_kernel(x_ref, w1_ref, w2_ref, w3_ref,
                      g1_ref, b1_ref, g2_ref, b2_ref, g3_ref, b3_ref,
                      out_ref, tap_ref):
    N, H, W, Cin = x_ref.shape
    P = w1_ref.shape[1]
    Cout = w3_ref.shape[1]
    M = N * H * W
    inv_m = 1.0 / M

    def bn(h, gamma, beta, relu):
        # Batch-statistic BN (PyTorch training-mode forward) folded into a
        # per-channel scale/shift: the (M, C) normalize pass is one fused
        # mul+add (+ optional relu) instead of sub/mul/mul/add.
        # TODO(synk): single-pass var = E[x^2] - E[x]^2 is cancellation-prone
        # when |mean| >> std (post-ReLU real data); use two-pass for production.
        s = jnp.sum(h, axis=0, keepdims=True)
        ss = jnp.sum(h * h, axis=0, keepdims=True)
        mean = s * inv_m
        var = ss * inv_m - mean * mean
        a = gamma * lax.rsqrt(var + EPS)          # (1, C)
        c = beta - mean * a                       # (1, C)
        y = h * a + c
        return jnp.maximum(y, 0.0) if relu else y

    x2d = x_ref[...].reshape(M, Cin)              # f32, kept live for residual

    # ---- conv1 (1x1) + bn1 + relu : bf16 MXU operands, f32 accumulation -----
    h1 = jnp.dot(x2d.astype(jnp.bfloat16), w1_ref[...],
                 preferred_element_type=jnp.float32)
    h1 = bn(h1, g1_ref[...], b1_ref[...], relu=True)          # (M, P) f32

    # ---- conv2 (3x3, stride=1, pad=1) as ONE K = 9P matmul -------------------
    # Tap (kh, kw) reads h1[n, i+dh, j+dw, :] (dh=kh-1, dw=kw-1).  On the
    # flattened (M, P) activation that is a sublane roll by -(dh*W + dw)
    # (pltpu.roll follows np.roll semantics: result[r] = x[(r - shift) % M],
    # verified by the standalone check in __main__) plus a boundary mask that
    # also kills inter-image wraparound.  Each masked tap is cast to bf16 and
    # stored into one column block of the (M, 9P) VMEM scratch; conv2 is then a
    # single MXU matmul with K = 9P against the host-preflattened (9P, P)
    # weight, keeping accumulation inside the systolic array.
    row = lax.broadcasted_iota(jnp.int32, (M, 1), 0)
    i_idx = (row // W) % H
    j_idx = row % W
    # Boundary masks hoisted out of the tap loop.
    row_ok = {-1: i_idx >= 1, 0: None, 1: i_idx + 1 < H}
    col_ok = {-1: j_idx >= 1, 0: None, 1: j_idx + 1 < W}

    for kh in range(3):
        dh = kh - 1
        for kw in range(3):
            dw = kw - 1
            src_off = dh * W + dw
            if src_off == 0:
                tap = h1
            else:
                tap = pltpu.roll(h1, shift=(-src_off) % M, axis=0)
            valid = row_ok[dh]
            if col_ok[dw] is not None:
                valid = col_ok[dw] if valid is None else (valid & col_ok[dw])
            if valid is not None:
                # Mask in f32 (v5e has no bf16 VPU); single bf16 cast right at
                # the store, so no packed-bf16 sublane rolls are ever needed.
                tap = jnp.where(valid, tap, 0.0)
            t = kh * 3 + kw
            tap_ref[:, pl.ds(t * P, P)] = tap.astype(jnp.bfloat16)

    h2 = jnp.dot(tap_ref[...], w2_ref[...],
                 preferred_element_type=jnp.float32)           # K = 9P = 576
    h2 = bn(h2, g2_ref[...], b2_ref[...], relu=True)           # (M, P) f32

    # ---- conv3 (1x1) + bn3 ---------------------------------------------------
    h3 = jnp.dot(h2.astype(jnp.bfloat16), w3_ref[...],
                 preferred_element_type=jnp.float32)
    h3 = bn(h3, g3_ref[...], b3_ref[...], relu=False)          # (M, Cout) f32

    # ---- residual add + final relu (stride=1, downsample=None) --------------
    out_ref[...] = jnp.maximum(h3 + x2d, 0.0).reshape(N, H, W, Cout)


def prepare_params(w1, w2, w3, g1, b1, g2, b2, g3, b3):
    """One-time host-side layout prep (call once at model init, not per call):
    bf16 weight casts and the (3,3,P,P) HWIO -> (9P, P) flatten whose K order
    (kh, kw, cin) matches the tap ordering used in the kernel."""
    Cin, P = w1.shape
    Cout = w3.shape[1]
    assert w2.shape == (3, 3, P, P)
    return (
        w1.astype(jnp.bfloat16),                    # (Cin, P)
        w2.reshape(9 * P, P).astype(jnp.bfloat16),  # (9P, P)
        w3.astype(jnp.bfloat16),                    # (P, Cout)
        g1.reshape(1, P).astype(jnp.float32),
        b1.reshape(1, P).astype(jnp.float32),
        g2.reshape(1, P).astype(jnp.float32),
        b2.reshape(1, P).astype(jnp.float32),
        g3.reshape(1, Cout).astype(jnp.float32),
        b3.reshape(1, Cout).astype(jnp.float32),
    )


def bottleneck_pallas(x_nhwc, params):
    w1, w2f, w3, g1, b1, g2, b2, g3, b3 = params
    N, H, W, Cin = x_nhwc.shape
    P = w1.shape[1]
    Cout = w3.shape[1]
    M = N * H * W
    # Residual path of this kernel only covers stride=1, downsample=None.
    assert Cin == Cout, "kernel requires Cin == Cout (downsample=None path)"
    assert w2f.shape == (9 * P, P)

    vmem = pl.BlockSpec(memory_space=pltpu.MemorySpace.VMEM)

    flops = 2 * M * (Cin * P + 9 * P * P + P * Cout)
    bytes_accessed = int(4 * (x_nhwc.size + M * Cout)            # x in, out
                         + 2 * (w1.size + w2f.size + w3.size)    # bf16 weights
                         + 4 * (4 * P + 2 * Cout))               # bn params
    cost = pl.CostEstimate(flops=flops, transcendentals=0,
                           bytes_accessed=bytes_accessed)

    return pl.pallas_call(
        bottleneck_kernel,
        out_shape=jax.ShapeDtypeStruct((N, H, W, Cout), jnp.float32),
        in_specs=[vmem] * 10,
        out_specs=vmem,
        scratch_shapes=[pltpu.VMEM((M, 9 * P), jnp.bfloat16)],   # im2col taps
        compiler_params=pltpu.CompilerParams(vmem_limit_bytes=32 * 1024 * 1024),
        cost_estimate=cost,
    )(x_nhwc, w1, w2f, w3, g1, b1, g2, b2, g3, b3)


def _roll_convention_check():
    """Direct unit check that pltpu.roll matches np.roll semantics
    (result[r] = x[(r - shift) % M]) — review correctness item."""
    def k(x_ref, o_ref):
        o_ref[...] = pltpu.roll(x_ref[...], shift=3, axis=0)
    x = jnp.arange(16 * 128, dtype=jnp.float32).reshape(16, 128)
    out = pl.pallas_call(
        k, out_shape=jax.ShapeDtypeStruct((16, 128), jnp.float32))(x)
    out = jax.block_until_ready(out)
    assert jnp.array_equal(out, jnp.roll(x, 3, axis=0)), \
        "pltpu.roll does not follow np.roll convention"


# ---------------- pure-JAX reference (for correctness check) ----------------
# Matches the kernel's numerics: bf16 conv operands, f32 accumulation,
# f32 batch-stat BN.
def _conv(x, w_hwio, pad):
    return lax.conv_general_dilated(
        x.astype(jnp.bfloat16), w_hwio.astype(jnp.bfloat16),
        window_strides=(1, 1), padding=pad,
        dimension_numbers=('NHWC', 'HWIO', 'NHWC'),
        preferred_element_type=jnp.float32)


def _bn(h, g, b):
    mean = h.mean(axis=(0, 1, 2), keepdims=True)
    var = ((h - mean) ** 2).mean(axis=(0, 1, 2), keepdims=True)
    return (h - mean) / jnp.sqrt(var + EPS) * g + b


def bottleneck_ref(x_nhwc, w1, w2, w3, g1, b1, g2, b2, g3, b3):
    Cin, P = w1.shape
    Cout = w3.shape[1]
    out = _conv(x_nhwc, w1.reshape(1, 1, Cin, P), ((0, 0), (0, 0)))
    out = jax.nn.relu(_bn(out, g1, b1))
    out = _conv(out, w2, ((1, 1), (1, 1)))
    out = jax.nn.relu(_bn(out, g2, b2))
    out = _conv(out, w3.reshape(1, 1, P, Cout), ((0, 0), (0, 0)))
    out = _bn(out, g3, b3)
    return jax.nn.relu(out + x_nhwc)


if __name__ == "__main__":
    _roll_convention_check()

    # Bottleneck(inplanes=256, planes=64, stride=1, downsample=None)
    # Lane-dense channels: Cin = Cout = 4*planes = 256 (residual add valid).
    N, planes, H, W = 2, 64, 16, 16
    inplanes = Cout = planes * 4

    key = jax.random.PRNGKey(0)
    ks = jax.random.split(key, 10)
    x_nchw = jax.random.normal(ks[0], (N, inplanes, H, W), jnp.float32)

    # Weights in kernel layout (equivalent to torch (O,I,kh,kw) permutations).
    w1 = jax.random.normal(ks[1], (inplanes, planes), jnp.float32) * 0.1      # conv1
    w2 = jax.random.normal(ks[2], (3, 3, planes, planes), jnp.float32) * 0.1  # conv2 HWIO
    w3 = jax.random.normal(ks[3], (planes, Cout), jnp.float32) * 0.1          # conv3
    g1 = 1.0 + 0.1 * jax.random.normal(ks[4], (planes,), jnp.float32)
    b1 = 0.1 * jax.random.normal(ks[5], (planes,), jnp.float32)
    g2 = 1.0 + 0.1 * jax.random.normal(ks[6], (planes,), jnp.float32)
    b2 = 0.1 * jax.random.normal(ks[7], (planes,), jnp.float32)
    g3 = 1.0 + 0.1 * jax.random.normal(ks[8], (Cout,), jnp.float32)
    b3 = 0.1 * jax.random.normal(ks[9], (Cout,), jnp.float32)

    params = prepare_params(w1, w2, w3, g1, b1, g2, b2, g3, b3)  # once, at init
    x_nhwc = jnp.transpose(x_nchw, (0, 2, 3, 1))                 # NCHW -> NHWC

    out_nhwc = bottleneck_pallas(x_nhwc, params)
    out_nhwc = jax.block_until_ready(out_nhwc)
    out_nchw = jnp.transpose(out_nhwc, (0, 3, 1, 2))             # back to NCHW

    ref = bottleneck_ref(x_nhwc, w1, w2, w3, g1, b1, g2, b2, g3, b3)
    assert out_nchw.shape == (N, inplanes, H, W)
    # bf16 MXU operands (in both kernel and reference) -> tolerance above f32.
    assert jnp.allclose(out_nhwc, ref, atol=2e-2, rtol=2e-2), \
        float(jnp.max(jnp.abs(out_nhwc - ref)))

    print("KERNEL_OK")
</pallas_src>

<mosaic_0001>
module attributes {stable_mosaic.version = 11 : i64} {
  func.func @k(%arg0: memref<16x128xf32, #tpu.memory_space<vmem>>, %arg1: memref<16x128xf32, #tpu.memory_space<vmem>>) attributes {dimension_semantics = [], scalar_prefetch = 0 : i64, scratch_operands = 0 : i64, tpu.core_type = #tpu.core_type<tc>} {
    %c0 = arith.constant 0 : index
    %c0_0 = arith.constant 0 : index
    %0 = vector.load %arg0[%c0, %c0_0] : memref<16x128xf32, #tpu.memory_space<vmem>>, vector<16x128xf32>
    %c3_i32 = arith.constant 3 : i32
    %1 = tpu.dynamic_rotate %0 by %c3_i32 dim 0 : vector<16x128xf32>, i32 -> vector<16x128xf32>
    %c0_1 = arith.constant 0 : index
    %c0_2 = arith.constant 0 : index
    %2 = vector.load %arg1[%c0_1, %c0_2] : memref<16x128xf32, #tpu.memory_space<vmem>>, vector<16x128xf32>
    tpu.vector_store %arg1[%c0_1, %c0_2], %1 {strides = array<i32>} : memref<16x128xf32, #tpu.memory_space<vmem>>, vector<16x128xf32>,
    return
  }
}

</mosaic_0001>

<llo_original>
// kernel: tpu_custom_call.1
$region0: #{tpu_custom_call.1}
  #allocation0 [shape = 'u32[]', space=smem, size = 0x4, offset = 0x4, fixed_abs, tag = 'smem constant byte address 0x4 - core index']
  #allocation1 [shape = 'u32[144,128]{1,0:T(1,128)}', space=vmem, size = 0x12000, scoped, tag = 'internal scratch']
  %s0 = inlined_call_operand.hbm [shape: f32[16,128], index: 0, kind: input, shape index: {}]
  %s1 = inlined_call_operand.hbm [shape: f32[16,128], index: 1, kind: output, shape index: {}]
  %s2 = sld [smem:[#allocation0]]
  $region18: #{tpu_custom_call.1} parent=0
    _
  %s4 = ssub.s32 1, %s2
  %s5 = scalar_select 0, %s4, %s2
  $region1: #{tpu_custom_call.1} parent=0
    #allocation2 [shape = 'u8[8192]{0}', space=vmem, size = 0x2000, scoped, tag = 'input window, operand 0, single buffered']
    #allocation3 [shape = 's32[1]{0}', space=sflag, size = 0x4, scoped, tag = 'scoped memory for tpu_custom_call.1']
    #allocation4 [shape = 's32[1]{0}', space=sflag, size = 0x4, scoped, tag = 'scoped memory for tpu_custom_call.1']
    #allocation5 [shape = 'u8[8192]{0}', space=vmem, size = 0x2000, scoped, tag = 'output window, operand 0, single buffered']
    %6 = vsyncpa [#allocation3], 0
    %7 = vsyncpa [#allocation4], 0
    // Predicated region
    $region2: #{tpu_custom_call.1} parent=1 // pred_check
      _
    $region3: #{tpu_custom_call.1} parent=1 // pred_check_branch
      %9 = sbr.rel (0) target = $region5
    $region4: #{tpu_custom_call.1} parent=1 // pred_region
      %s11 = ssub.s32 256, 256
      %12 = vsyncadd [#allocation3], %s11
      %s13 = sshll.u32 [#allocation2], 4
      %s14 = int_to_ptr.vmem [resolvable:$true] %s13
      %19 = dma.hbm_to_vmem [thread:$0]  %s0, 256, %s14, [#allocation3], 128, 128, 8
    $region5: #{tpu_custom_call.1} parent=1 // pred_fallthru
      _
    // Predicated region
    $region6: #{tpu_custom_call.1} parent=1 // pred_check
      _
    $region7: #{tpu_custom_call.1} parent=1 // pred_check_branch
      %21 = sbr.rel (0) target = $region9
    $region8: #{tpu_custom_call.1} parent=1 // pred_region
      %22 = dma.done [#allocation3], 256
    $region9: #{tpu_custom_call.1} parent=1 // pred_fallthru
      _
    %v23 = vld [vmem:[#allocation2] sm:$0xff]
    %v24 = vld [vmem:[#allocation2 + $0x8] sm:$0xff]
    %v25 = vrot.slane %v23, 5
    %v26 = vrot.slane %v24, 5
    %v27 = vlaneseq
    %v28 = vshrl.u32 %v27, 7
    %vm29 = vcmp.lt.s32.totalorder %v28, 3
    %v30 = vsel %vm29, %v25, %v26
    %v31 = vsel %vm29, %v26, %v25
    %32 = vst [vmem:[#allocation5] sm:$0xff] %v31
    %33 = vst [vmem:[#allocation5 + $0x8] sm:$0xff] %v30
    // Predicated region
    $region10: #{tpu_custom_call.1} parent=1 // pred_check
      _
    $region11: #{tpu_custom_call.1} parent=1 // pred_check_branch
      %35 = sbr.rel (0) target = $region13
    $region12: #{tpu_custom_call.1} parent=1 // pred_region
      %s37 = ssub.s32 256, 256
      %38 = vsyncadd [#allocation4], %s37
      %s39 = sshll.u32 [#allocation5], 4
      %s40 = int_to_ptr.vmem [resolvable:$true] %s39
      %45 = dma.vmem_to_hbm [thread:$0]  %s40, 256, %s1, [#allocation4], 128, 128, 8
    $region13: #{tpu_custom_call.1} parent=1 // pred_fallthru
      _
    // Predicated region
    $region14: #{tpu_custom_call.1} parent=1 // pred_check
      _
    $region15: #{tpu_custom_call.1} parent=1 // pred_check_branch
      %47 = sbr.rel (0) target = $region17
    $region16: #{tpu_custom_call.1} parent=1 // pred_region
      %48 = dma.done [#allocation4], 256
    $region17: #{tpu_custom_call.1} parent=1 // pred_fallthru
      _
    %49 = vsyncpa [#allocation3], 1
    %50 = vsyncpa [#allocation4], 1

</llo_original>
